<compile_context>
chip_gen: v7x
topology: tpu7x:2x2x1
jax: 0.10.0
libtpu: 0.0.40
codegen_flags: <defaults>
</compile_context>

<pallas_src>
import functools
import math

import jax
import jax.numpy as jnp
from jax import lax
from jax.experimental import pallas as pl
from jax.experimental.pallas import tpu as pltpu

_LOG_2PI = math.log(2.0 * math.pi)
_F32 = jnp.float32


# ---------------------------------------------------------------------------
# Small helpers
# ---------------------------------------------------------------------------
def _round_up(n, m):
    return ((n + m - 1) // m) * m


def _sublane_multiple(dtype):
    # f32 -> 8, bf16/f16 -> 16, int8/bool -> 32
    return max(8, 32 // jnp.dtype(dtype).itemsize)


def _block_vmem_bytes(block_shape, dtype):
    """VMEM footprint of one block with (sublane, lane) tile padding."""
    itemsize = jnp.dtype(dtype).itemsize
    dims = (1,) * max(0, 2 - len(block_shape)) + tuple(block_shape)
    lead = 1
    for d in dims[:-2]:
        lead *= d
    return (lead * _round_up(dims[-2], _sublane_multiple(dtype))
            * _round_up(dims[-1], 128) * itemsize)


def _choose_time_block(seq_len, fits, cap, sub_mult):
    """Largest time-block that fits the VMEM budget (full seq, or a multiple of
    the sublane tile so the batch-major mask BlockSpec stays legal)."""
    if seq_len <= cap and fits(seq_len):
        return seq_len
    kb = min(cap, max(sub_mult, (seq_len // sub_mult) * sub_mult))
    kb = max(sub_mult, (kb // sub_mult) * sub_mult)
    while kb > sub_mult and not fits(kb):
        kb -= sub_mult
    return min(kb, seq_len)


# ---------------------------------------------------------------------------
# Kernels.  Grid = (core, time_block); blocks carry the full (B, feat) slab of
# `kb` time steps.  Scratch accumulators are per-core; outputs are per-core
# partial sums stored lane-dense as (1, 8, 128) tiles.
# ---------------------------------------------------------------------------
def _vrnn_masked_kernel(x_ref, dmu_ref, dlv_ref, msk_ref,
                        emu_ref, elv_ref, pmu_ref, plv_ref,
                        kld_out, nll_out,
                        kld_acc, nll_acc,
                        *, kb, seq_len):
    c = pl.program_id(0)
    i = pl.program_id(1)

    @pl.when(i == 0)
    def _init():
        kld_acc[...] = jnp.zeros_like(kld_acc)
        nll_acc[...] = jnp.zeros_like(nll_acc)

    # Global time offset of this (possibly clamped / partial) block.  Rows at
    # t >= seq_len are zeroed below, making tail padding and duplicate blocks
    # from the core split exactly neutral (NaN/inf safe via jnp.where).
    t0 = (c * pl.num_programs(1) + i) * kb

    # ---- KL(q || p) on the full (kb, B, Z) block (mask-free) --------------
    elv = elv_ref[...].astype(_F32)
    plv = plv_ref[...].astype(_F32)
    dmean = emu_ref[...].astype(_F32) - pmu_ref[...].astype(_F32)
    kld_elem = (plv - elv) + (jnp.exp(elv) + dmean * dmean) * jnp.exp(-plv) - 1.0
    trow = lax.broadcasted_iota(jnp.int32, kld_elem.shape, 0) + t0
    kld_elem = jnp.where(trow < seq_len, kld_elem, 0.0)
    kld_acc[...] += 0.5 * jnp.sum(kld_elem, axis=0)          # major-dim sum = VPU adds

    # ---- Masked diagonal-Gaussian NLL (variable part only) ----------------
    # msk arrives batch-major (B, kb, D); pairing it per time step avoids any
    # transpose (wrapper or in-kernel).  x/dec slices at a static leading
    # index are free; the mask slice is a cheap sublane select.
    part = jnp.zeros(nll_acc.shape, _F32)
    for j in range(kb):
        m = msk_ref[:, j, :].astype(_F32)                            # (B, D)
        diff = (x_ref[j].astype(_F32) - dmu_ref[j].astype(_F32)) * m
        lvm = dlv_ref[j].astype(_F32) * m
        term = 0.5 * diff * diff * jnp.exp(-0.5 * lvm) + 0.25 * lvm
        part = part + jnp.where(t0 + j < seq_len, term, 0.0)
    nll_acc[...] += part

    # ---- Epilogue: single cross-lane reduce + lane-dense store per core ---
    @pl.when(i == pl.num_programs(1) - 1)
    def _finish():
        kld_out[...] = jnp.full(kld_out.shape, jnp.sum(kld_acc[...]), _F32)
        nll_out[...] = jnp.full(nll_out.shape, jnp.sum(nll_acc[...]), _F32)


def _vrnn_unmasked_kernel(x_ref, dmu_ref, dlv_ref,
                          emu_ref, elv_ref, pmu_ref, plv_ref,
                          kld_out, nll_out, mae_out,
                          kld_acc, nll_acc, mae_acc,
                          *, kb, seq_len):
    c = pl.program_id(0)
    i = pl.program_id(1)

    @pl.when(i == 0)
    def _init():
        kld_acc[...] = jnp.zeros_like(kld_acc)
        nll_acc[...] = jnp.zeros_like(nll_acc)
        mae_acc[...] = jnp.zeros_like(mae_acc)

    t0 = (c * pl.num_programs(1) + i) * kb

    elv = elv_ref[...].astype(_F32)
    plv = plv_ref[...].astype(_F32)
    dmean = emu_ref[...].astype(_F32) - pmu_ref[...].astype(_F32)
    kld_elem = (plv - elv) + (jnp.exp(elv) + dmean * dmean) * jnp.exp(-plv) - 1.0
    trow_z = lax.broadcasted_iota(jnp.int32, kld_elem.shape, 0) + t0
    kld_elem = jnp.where(trow_z < seq_len, kld_elem, 0.0)
    kld_acc[...] += 0.5 * jnp.sum(kld_elem, axis=0)

    x = x_ref[...].astype(_F32)
    dmu = dmu_ref[...].astype(_F32)
    dlv = dlv_ref[...].astype(_F32)
    diff = x - dmu
    nll_elem = 0.5 * (diff * diff * jnp.exp(-dlv) + dlv)
    mae_elem = jnp.abs(diff)
    trow_d = lax.broadcasted_iota(jnp.int32, x.shape, 0) + t0
    valid_d = trow_d < seq_len
    nll_acc[...] += jnp.sum(jnp.where(valid_d, nll_elem, 0.0), axis=0)
    mae_acc[...] += jnp.sum(jnp.where(valid_d, mae_elem, 0.0), axis=0)

    @pl.when(i == pl.num_programs(1) - 1)
    def _finish():
        kld_out[...] = jnp.full(kld_out.shape, jnp.sum(kld_acc[...]), _F32)
        nll_out[...] = jnp.full(nll_out.shape, jnp.sum(nll_acc[...]), _F32)
        mae_out[...] = jnp.full(mae_out.shape, jnp.sum(mae_acc[...]), _F32)


# ---------------------------------------------------------------------------
# Wrapper
# ---------------------------------------------------------------------------
def vrnn_loss(all_prior_mean, all_prior_std, all_x, all_enc_mean, all_enc_std,
              all_dec_mean, all_dec_std, msk, eval_x, eval_msk,
              *, beta=1.0, isreconmsk=True, lambda1=0.0, model_params=None,
              time_block=None, vmem_budget_bytes=12 * 1024 * 1024):
    """Fused Pallas-TPU forward of VRNNLoss.  Returns a jnp scalar.

    all_* are time-major (T, B, D) / (T, B, Z); msk/eval_* are batch-major
    (B, T, D) exactly as in the torch indexing msk[:, t, :].
    """
    del lambda1, model_params        # stored by the torch module, unused in forward
    # mae in the isreconmsk=True branch never enters the returned loss, so the
    # eval tensors are not streamed at all (saves a full HBM read of both).
    del eval_x, eval_msk

    T, B, D = all_x.shape
    Z = all_enc_mean.shape[-1]

    d_arrays = [all_x, all_dec_mean, all_dec_std]                    # (T, B, D)
    z_arrays = [all_enc_mean, all_enc_std,                           # (T, B, Z)
                all_prior_mean, all_prior_std]

    sub_mult = _sublane_multiple(msk.dtype) if isreconmsk else 8

    def fits(kb):
        # Double-buffered, lane/sublane-padded VMEM footprint of one grid step.
        total = 0
        for a in d_arrays:
            total += 2 * _block_vmem_bytes((kb, B, D), a.dtype)
        if isreconmsk:
            total += 2 * _block_vmem_bytes((B, kb, D), msk.dtype)
        for a in z_arrays:
            total += 2 * _block_vmem_bytes((kb, B, Z), a.dtype)
        total += _block_vmem_bytes((B, Z), _F32)                     # kld scratch
        total += _block_vmem_bytes((B, D), _F32) * (1 if isreconmsk else 2)
        total += 2 * 3 * _block_vmem_bytes((8, 128), _F32)           # outputs
        return total <= vmem_budget_bytes

    # Masked branch unrolls kb time slices in-kernel -> keep the unroll short.
    cap = 16 if isreconmsk else 512
    if time_block is not None:
        kb = max(1, min(int(time_block), T))
        if kb < T:
            kb = min(T, max(sub_mult, (kb // sub_mult) * sub_mult))
    else:
        kb = _choose_time_block(T, fits, cap, sub_mult)
    # TODO(synk): if a single time step (B*D) alone exceeds the VMEM budget,
    # the feature/batch axes would also need tiling; not needed at these sizes.

    nblk = -(-T // kb)                        # number of real time blocks
    ncore = 2 if nblk >= 2 else 1             # v7x: split across both TCs
    spc = -(-nblk // ncore)                   # steps per core (arbitrary axis)
    grid = (ncore, spc)

    def blk_idx(c, i):
        # Clamp so a core's padding step re-reads the last valid block; its
        # contribution is zeroed in-kernel via the t >= seq_len mask.
        return jnp.minimum(c * spc + i, nblk - 1)

    d_spec = pl.BlockSpec((kb, B, D), lambda c, i: (blk_idx(c, i), 0, 0))
    z_spec = pl.BlockSpec((kb, B, Z), lambda c, i: (blk_idx(c, i), 0, 0))
    m_spec = pl.BlockSpec((B, kb, D), lambda c, i: (0, blk_idx(c, i), 0))

    out_spec = pl.BlockSpec((1, 8, 128), lambda c, i: (c, 0, 0))
    out_sds = jax.ShapeDtypeStruct((ncore, 8, 128), _F32)

    if isreconmsk:
        kernel = functools.partial(_vrnn_masked_kernel, kb=kb, seq_len=T)
        inputs = d_arrays + [msk] + z_arrays
        in_specs = [d_spec] * 3 + [m_spec] + [z_spec] * 4
        out_shape = (out_sds, out_sds)
        out_specs = (out_spec, out_spec)
        scratch = [pltpu.VMEM((B, Z), _F32), pltpu.VMEM((B, D), _F32)]
    else:
        kernel = functools.partial(_vrnn_unmasked_kernel, kb=kb, seq_len=T)
        inputs = d_arrays + z_arrays
        in_specs = [d_spec] * 3 + [z_spec] * 4
        out_shape = (out_sds, out_sds, out_sds)
        out_specs = (out_spec, out_spec, out_spec)
        scratch = [pltpu.VMEM((B, Z), _F32), pltpu.VMEM((B, D), _F32),
                   pltpu.VMEM((B, D), _F32)]

    outs = pl.pallas_call(
        kernel,
        out_shape=out_shape,
        grid=grid,
        in_specs=in_specs,
        out_specs=out_specs,
        scratch_shapes=scratch,
        compiler_params=pltpu.CompilerParams(
            dimension_semantics=("parallel", "arbitrary"),
            vmem_limit_bytes=32 * 1024 * 1024),
    )(*inputs)

    # Per-core partial sums live at [:, 0, 0].
    kld_sum = beta * jnp.sum(outs[0][:, 0, 0])
    # Hoisted per-element constant of -log_prob (identical in both branches).
    nll_sum = jnp.sum(outs[1][:, 0, 0]) + 0.5 * _LOG_2PI * (T * B * D)

    if isreconmsk:
        # loss = kld_loss.mean() + nll_loss / len(kld_loss)
        return (kld_sum + nll_sum) / B
    mae_sum = jnp.sum(outs[2][:, 0, 0])
    # loss = mean(kld_loss + mae_loss + nll_loss)
    return (kld_sum + nll_sum + mae_sum) / B


# ---------------------------------------------------------------------------
# Pure-JAX reference (direct transcription of the torch forward)
# ---------------------------------------------------------------------------
def _reference(all_prior_mean, all_prior_std, all_x, all_enc_mean, all_enc_std,
               all_dec_mean, all_dec_std, msk, eval_x, eval_msk,
               beta=1.0, isreconmsk=True):
    del eval_x, eval_msk
    T, B, D = all_x.shape
    kld = 0.5 * jnp.sum(
        all_prior_std - all_enc_std
        + (jnp.exp(all_enc_std) + (all_enc_mean - all_prior_mean) ** 2)
        / jnp.exp(all_prior_std) - 1.0, axis=2)               # (T, B)
    kld_loss = beta * jnp.sum(kld, axis=0)                    # (B,)
    if isreconmsk:
        m = jnp.transpose(msk, (1, 0, 2))                     # (T, B, D)
        mu = all_dec_mean * m
        s = jnp.exp(0.5 * all_dec_std * m)                    # covariance diagonal
        xm = all_x * m
        logp = -0.5 * ((xm - mu) ** 2 / s + jnp.log(s) + _LOG_2PI)
        nll_loss = -jnp.sum(logp)
        return jnp.mean(kld_loss) + nll_loss / B
    sigma = jnp.exp(0.5 * all_dec_std)
    logp = (-0.5 * ((all_x - all_dec_mean) / sigma) ** 2
            - jnp.log(sigma) - 0.5 * _LOG_2PI)
    nll_loss = -jnp.sum(jnp.sum(logp, axis=2), axis=0)        # (B,)
    mae_loss = jnp.sum(jnp.sum(jnp.abs(all_dec_mean - all_x), axis=2), axis=0)
    return jnp.mean(kld_loss + mae_loss + nll_loss)


if __name__ == "__main__":
    key = jax.random.PRNGKey(0)
    beta = 0.7

    def make_inputs(T, B, D, Z, k):
        ks = jax.random.split(k, 10)
        all_x = jax.random.normal(ks[0], (T, B, D), jnp.float32)
        all_dec_mean = jax.random.normal(ks[1], (T, B, D), jnp.float32)
        all_dec_std = 0.1 * jax.random.normal(ks[2], (T, B, D), jnp.float32)
        all_enc_mean = jax.random.normal(ks[3], (T, B, Z), jnp.float32)
        all_enc_std = 0.1 * jax.random.normal(ks[4], (T, B, Z), jnp.float32)
        all_prior_mean = jax.random.normal(ks[5], (T, B, Z), jnp.float32)
        all_prior_std = 0.1 * jax.random.normal(ks[6], (T, B, Z), jnp.float32)
        msk = (jax.random.uniform(ks[7], (B, T, D)) > 0.3).astype(jnp.float32)
        eval_x = jax.random.normal(ks[8], (B, T, D), jnp.float32)
        eval_msk = (jax.random.uniform(ks[9], (B, T, D)) > 0.5).astype(jnp.float32)
        return (all_prior_mean, all_prior_std, all_x, all_enc_mean, all_enc_std,
                all_dec_mean, all_dec_std, msk, eval_x, eval_msk)

    k1, k2 = jax.random.split(key)
    small = make_inputs(6, 4, 32, 16, k1)    # single-block / full-dim path
    longer = make_inputs(21, 4, 32, 16, k2)  # multi-block, ragged tail, 2-core split

    cases = [
        (small, dict(isreconmsk=True)),
        (small, dict(isreconmsk=False)),
        (longer, dict(isreconmsk=True, time_block=8)),
        (longer, dict(isreconmsk=False, time_block=8)),
    ]
    for args, case in cases:
        loss = jax.block_until_ready(vrnn_loss(*args, beta=beta, **case))
        ref = _reference(*args, beta=beta, isreconmsk=case["isreconmsk"])
        tol = 2e-3 * max(1.0, abs(float(ref)))
        assert abs(float(loss) - float(ref)) < tol, (case, float(loss), float(ref))

    print("KERNEL_OK")
</pallas_src>

<mosaic_0001>
module attributes {stable_mosaic.version = 11 : i64} {
  func.func @_vrnn_masked_kernel(%arg0: i32, %arg1: i32, %arg2: memref<6x4x32xf32, #tpu.memory_space<vmem>>, %arg3: memref<6x4x32xf32, #tpu.memory_space<vmem>>, %arg4: memref<6x4x32xf32, #tpu.memory_space<vmem>>, %arg5: memref<4x6x32xf32, #tpu.memory_space<vmem>>, %arg6: memref<6x4x16xf32, #tpu.memory_space<vmem>>, %arg7: memref<6x4x16xf32, #tpu.memory_space<vmem>>, %arg8: memref<6x4x16xf32, #tpu.memory_space<vmem>>, %arg9: memref<6x4x16xf32, #tpu.memory_space<vmem>>, %arg10: memref<1x8x128xf32, #tpu.memory_space<vmem>>, %arg11: memref<1x8x128xf32, #tpu.memory_space<vmem>>, %arg12: memref<4x16xf32, #tpu.memory_space<vmem>>, %arg13: memref<4x32xf32, #tpu.memory_space<vmem>>) attributes {dimension_semantics = [#tpu.dimension_semantics<parallel>, #tpu.dimension_semantics<arbitrary>], iteration_bounds = array<i64: 1, 1>, scalar_prefetch = 0 : i64, scratch_operands = 2 : i64, tpu.core_type = #tpu.core_type<tc>, window_params = [{transform_indices = @transform_0, window_bounds = array<i64: 6, 4, 32>}, {transform_indices = @transform_1, window_bounds = array<i64: 6, 4, 32>}, {transform_indices = @transform_2, window_bounds = array<i64: 6, 4, 32>}, {transform_indices = @transform_3, window_bounds = array<i64: 4, 6, 32>}, {transform_indices = @transform_4, window_bounds = array<i64: 6, 4, 16>}, {transform_indices = @transform_5, window_bounds = array<i64: 6, 4, 16>}, {transform_indices = @transform_6, window_bounds = array<i64: 6, 4, 16>}, {transform_indices = @transform_7, window_bounds = array<i64: 6, 4, 16>}, {transform_indices = @transform_8, window_bounds = array<i64: 1, 8, 128>}, {transform_indices = @transform_9, window_bounds = array<i64: 1, 8, 128>}]} {
    %c0_i32 = arith.constant 0 : i32
    %0 = arith.cmpi eq, %arg1, %c0_i32 : i32
    %1 = arith.extui %0 : i1 to i32
    %c0_i32_0 = arith.constant 0 : i32
    %2 = arith.cmpi ne, %1, %c0_i32_0 : i32
    scf.if %2 {
      %cst_127 = arith.constant 0.000000e+00 : f32
      %198 = vector.broadcast %cst_127 : f32 to vector<4x16xf32>
      %c0_128 = arith.constant 0 : index
      %c0_129 = arith.constant 0 : index
      %199 = vector.load %arg12[%c0_128, %c0_129] : memref<4x16xf32, #tpu.memory_space<vmem>>, vector<4x16xf32>
      tpu.vector_store %arg12[%c0_128, %c0_129], %198 {strides = array<i32>} : memref<4x16xf32, #tpu.memory_space<vmem>>, vector<4x16xf32>,
      %cst_130 = arith.constant 0.000000e+00 : f32
      %200 = vector.broadcast %cst_130 : f32 to vector<4x32xf32>
      %c0_131 = arith.constant 0 : index
      %c0_132 = arith.constant 0 : index
      %201 = vector.load %arg13[%c0_131, %c0_132] : memref<4x32xf32, #tpu.memory_space<vmem>>, vector<4x32xf32>
      tpu.vector_store %arg13[%c0_131, %c0_132], %200 {strides = array<i32>} : memref<4x32xf32, #tpu.memory_space<vmem>>, vector<4x32xf32>,
    } else {
    }
    %c1_i32 = arith.constant 1 : i32
    %3 = arith.muli %arg0, %c1_i32 : i32
    %4 = arith.addi %3, %arg1 : i32
    %c6_i32 = arith.constant 6 : i32
    %5 = arith.muli %4, %c6_i32 : i32
    %c0 = arith.constant 0 : index
    %c0_1 = arith.constant 0 : index
    %c0_2 = arith.constant 0 : index
    %6 = vector.load %arg7[%c0, %c0_1, %c0_2] : memref<6x4x16xf32, #tpu.memory_space<vmem>>, vector<6x4x16xf32>
    %c0_3 = arith.constant 0 : index
    %c0_4 = arith.constant 0 : index
    %c0_5 = arith.constant 0 : index
    %7 = vector.load %arg9[%c0_3, %c0_4, %c0_5] : memref<6x4x16xf32, #tpu.memory_space<vmem>>, vector<6x4x16xf32>
    %c0_6 = arith.constant 0 : index
    %c0_7 = arith.constant 0 : index
    %c0_8 = arith.constant 0 : index
    %8 = vector.load %arg6[%c0_6, %c0_7, %c0_8] : memref<6x4x16xf32, #tpu.memory_space<vmem>>, vector<6x4x16xf32>
    %c0_9 = arith.constant 0 : index
    %c0_10 = arith.constant 0 : index
    %c0_11 = arith.constant 0 : index
    %9 = vector.load %arg8[%c0_9, %c0_10, %c0_11] : memref<6x4x16xf32, #tpu.memory_space<vmem>>, vector<6x4x16xf32>
    %10 = arith.subf %8, %9 : vector<6x4x16xf32>
    %11 = arith.subf %7, %6 : vector<6x4x16xf32>
    %12 = math.exp %6 : vector<6x4x16xf32>
    %13 = arith.mulf %10, %10 : vector<6x4x16xf32>
    %14 = arith.addf %12, %13 : vector<6x4x16xf32>
    %cst = arith.constant 0.000000e+00 : f32
    %15 = vector.broadcast %cst : f32 to vector<6x4x16xf32>
    %16 = arith.subf %15, %7 : vector<6x4x16xf32>
    %17 = math.exp %16 : vector<6x4x16xf32>
    %18 = arith.mulf %14, %17 : vector<6x4x16xf32>
    %19 = arith.addf %11, %18 : vector<6x4x16xf32>
    %cst_12 = arith.constant 1.000000e+00 : f32
    %20 = vector.broadcast %cst_12 : f32 to vector<6x4x16xf32>
    %21 = arith.subf %19, %20 : vector<6x4x16xf32>
    %22 = tpu.iota {dimensions = array<i32: 0>} : vector<6x4x16xi32>
    %23 = vector.broadcast %5 : i32 to vector<6x4x16xi32>
    %24 = arith.addi %22, %23 : vector<6x4x16xi32>
    %c6_i32_13 = arith.constant 6 : i32
    %25 = vector.broadcast %c6_i32_13 : i32 to vector<6x4x16xi32>
    %26 = arith.cmpi slt, %24, %25 : vector<6x4x16xi32>
    %cst_14 = arith.constant 0.000000e+00 : f32
    %27 = vector.broadcast %cst_14 : f32 to vector<6x4x16xf32>
    %28 = arith.select %26, %21, %27 : vector<6x4x16xi1>, vector<6x4x16xf32>
    %c0_15 = arith.constant 0 : index
    %c0_16 = arith.constant 0 : index
    %29 = vector.load %arg12[%c0_15, %c0_16] : memref<4x16xf32, #tpu.memory_space<vmem>>, vector<4x16xf32>
    %cst_17 = arith.constant dense<0.000000e+00> : vector<4x16xf32>
    %30 = vector.multi_reduction <add>, %28, %cst_17 [0] : vector<6x4x16xf32> to vector<4x16xf32>
    %cst_18 = arith.constant 5.000000e-01 : f32
    %31 = vector.broadcast %cst_18 : f32 to vector<4x16xf32>
    %32 = arith.mulf %31, %30 : vector<4x16xf32>
    %33 = arith.addf %29, %32 : vector<4x16xf32>
    %c0_19 = arith.constant 0 : index
    %c0_20 = arith.constant 0 : index
    %34 = vector.load %arg12[%c0_19, %c0_20] : memref<4x16xf32, #tpu.memory_space<vmem>>, vector<4x16xf32>
    tpu.vector_store %arg12[%c0_19, %c0_20], %33 {strides = array<i32>} : memref<4x16xf32, #tpu.memory_space<vmem>>, vector<4x16xf32>,
    %cst_21 = arith.constant 0.000000e+00 : f32
    %35 = vector.broadcast %cst_21 : f32 to vector<4x32xf32>
    %c0_22 = arith.constant 0 : index
    %c0_23 = arith.constant 0 : index
    %c0_24 = arith.constant 0 : index
    %36 = vector.load %arg5[%c0_22, %c0_23, %c0_24] : memref<4x6x32xf32, #tpu.memory_space<vmem>>, vector<4x1x32xf32>
    %37 = vector.shape_cast %36 : vector<4x1x32xf32> to vector<4x32xf32>
    %c0_25 = arith.constant 0 : index
    %c0_26 = arith.constant 0 : index
    %c0_27 = arith.constant 0 : index
    %38 = vector.load %arg2[%c0_25, %c0_26, %c0_27] : memref<6x4x32xf32, #tpu.memory_space<vmem>>, vector<1x4x32xf32>
    %39 = vector.shape_cast %38 : vector<1x4x32xf32> to vector<4x32xf32>
    %c0_28 = arith.constant 0 : index
    %c0_29 = arith.constant 0 : index
    %c0_30 = arith.constant 0 : index
    %40 = vector.load %arg3[%c0_28, %c0_29, %c0_30] : memref<6x4x32xf32, #tpu.memory_space<vmem>>, vector<1x4x32xf32>
    %41 = vector.shape_cast %40 : vector<1x4x32xf32> to vector<4x32xf32>
    %42 = arith.subf %39, %41 : vector<4x32xf32>
    %43 = arith.mulf %42, %37 : vector<4x32xf32>
    %c0_31 = arith.constant 0 : index
    %c0_32 = arith.constant 0 : index
    %c0_33 = arith.constant 0 : index
    %44 = vector.load %arg4[%c0_31, %c0_32, %c0_33] : memref<6x4x32xf32, #tpu.memory_space<vmem>>, vector<1x4x32xf32>
    %45 = vector.shape_cast %44 : vector<1x4x32xf32> to vector<4x32xf32>
    %46 = arith.mulf %45, %37 : vector<4x32xf32>
    %cst_34 = arith.constant 5.000000e-01 : f32
    %47 = vector.broadcast %cst_34 : f32 to vector<4x32xf32>
    %48 = arith.mulf %47, %43 : vector<4x32xf32>
    %49 = arith.mulf %48, %43 : vector<4x32xf32>
    %cst_35 = arith.constant -5.000000e-01 : f32
    %50 = vector.broadcast %cst_35 : f32 to vector<4x32xf32>
    %51 = arith.mulf %50, %46 : vector<4x32xf32>
    %52 = math.exp %51 : vector<4x32xf32>
    %53 = arith.mulf %49, %52 : vector<4x32xf32>
    %cst_36 = arith.constant 2.500000e-01 : f32
    %54 = vector.broadcast %cst_36 : f32 to vector<4x32xf32>
    %55 = arith.mulf %54, %46 : vector<4x32xf32>
    %56 = arith.addf %53, %55 : vector<4x32xf32>
    %c0_i32_37 = arith.constant 0 : i32
    %57 = arith.addi %5, %c0_i32_37 : i32
    %c6_i32_38 = arith.constant 6 : i32
    %58 = arith.cmpi slt, %57, %c6_i32_38 : i32
    %cst_39 = arith.constant 0.000000e+00 : f32
    %59 = vector.broadcast %cst_39 : f32 to vector<4x32xf32>
    %60 = arith.select %58, %56, %59 : vector<4x32xf32>
    %61 = arith.addf %35, %60 : vector<4x32xf32>
    %c0_40 = arith.constant 0 : index
    %c1 = arith.constant 1 : index
    %c0_41 = arith.constant 0 : index
    %62 = vector.load %arg5[%c0_40, %c1, %c0_41] : memref<4x6x32xf32, #tpu.memory_space<vmem>>, vector<4x1x32xf32>
    %63 = vector.shape_cast %62 : vector<4x1x32xf32> to vector<4x32xf32>
    %c1_42 = arith.constant 1 : index
    %c0_43 = arith.constant 0 : index
    %c0_44 = arith.constant 0 : index
    %64 = vector.load %arg2[%c1_42, %c0_43, %c0_44] : memref<6x4x32xf32, #tpu.memory_space<vmem>>, vector<1x4x32xf32>
    %65 = vector.shape_cast %64 : vector<1x4x32xf32> to vector<4x32xf32>
    %c1_45 = arith.constant 1 : index
    %c0_46 = arith.constant 0 : index
    %c0_47 = arith.constant 0 : index
    %66 = vector.load %arg3[%c1_45, %c0_46, %c0_47] : memref<6x4x32xf32, #tpu.memory_space<vmem>>, vector<1x4x32xf32>
    %67 = vector.shape_cast %66 : vector<1x4x32xf32> to vector<4x32xf32>
    %68 = arith.subf %65, %67 : vector<4x32xf32>
    %69 = arith.mulf %68, %63 : vector<4x32xf32>
    %c1_48 = arith.constant 1 : index
    %c0_49 = arith.constant 0 : index
    %c0_50 = arith.constant 0 : index
    %70 = vector.load %arg4[%c1_48, %c0_49, %c0_50] : memref<6x4x32xf32, #tpu.memory_space<vmem>>, vector<1x4x32xf32>
    %71 = vector.shape_cast %70 : vector<1x4x32xf32> to vector<4x32xf32>
    %72 = arith.mulf %71, %63 : vector<4x32xf32>
    %cst_51 = arith.constant 5.000000e-01 : f32
    %73 = vector.broadcast %cst_51 : f32 to vector<4x32xf32>
    %74 = arith.mulf %73, %69 : vector<4x32xf32>
    %75 = arith.mulf %74, %69 : vector<4x32xf32>
    %cst_52 = arith.constant -5.000000e-01 : f32
    %76 = vector.broadcast %cst_52 : f32 to vector<4x32xf32>
    %77 = arith.mulf %76, %72 : vector<4x32xf32>
    %78 = math.exp %77 : vector<4x32xf32>
    %79 = arith.mulf %75, %78 : vector<4x32xf32>
    %cst_53 = arith.constant 2.500000e-01 : f32
    %80 = vector.broadcast %cst_53 : f32 to vector<4x32xf32>
    %81 = arith.mulf %80, %72 : vector<4x32xf32>
    %82 = arith.addf %79, %81 : vector<4x32xf32>
    %c1_i32_54 = arith.constant 1 : i32
    %83 = arith.addi %5, %c1_i32_54 : i32
    %c6_i32_55 = arith.constant 6 : i32
    %84 = arith.cmpi slt, %83, %c6_i32_55 : i32
    %cst_56 = arith.constant 0.000000e+00 : f32
    %85 = vector.broadcast %cst_56 : f32 to vector<4x32xf32>
    %86 = arith.select %84, %82, %85 : vector<4x32xf32>
    %87 = arith.addf %61, %86 : vector<4x32xf32>
    %c0_57 = arith.constant 0 : index
    %c2 = arith.constant 2 : index
    %c0_58 = arith.constant 0 : index
    %88 = vector.load %arg5[%c0_57, %c2, %c0_58] : memref<4x6x32xf32, #tpu.memory_space<vmem>>, vector<4x1x32xf32>
    %89 = vector.shape_cast %88 : vector<4x1x32xf32> to vector<4x32xf32>
    %c2_59 = arith.constant 2 : index
    %c0_60 = arith.constant 0 : index
    %c0_61 = arith.constant 0 : index
    %90 = vector.load %arg2[%c2_59, %c0_60, %c0_61] : memref<6x4x32xf32, #tpu.memory_space<vmem>>, vector<1x4x32xf32>
    %91 = vector.shape_cast %90 : vector<1x4x32xf32> to vector<4x32xf32>
    %c2_62 = arith.constant 2 : index
    %c0_63 = arith.constant 0 : index
    %c0_64 = arith.constant 0 : index
    %92 = vector.load %arg3[%c2_62, %c0_63, %c0_64] : memref<6x4x32xf32, #tpu.memory_space<vmem>>, vector<1x4x32xf32>
    %93 = vector.shape_cast %92 : vector<1x4x32xf32> to vector<4x32xf32>
    %94 = arith.subf %91, %93 : vector<4x32xf32>
    %95 = arith.mulf %94, %89 : vector<4x32xf32>
    %c2_65 = arith.constant 2 : index
    %c0_66 = arith.constant 0 : index
    %c0_67 = arith.constant 0 : index
    %96 = vector.load %arg4[%c2_65, %c0_66, %c0_67] : memref<6x4x32xf32, #tpu.memory_space<vmem>>, vector<1x4x32xf32>
    %97 = vector.shape_cast %96 : vector<1x4x32xf32> to vector<4x32xf32>
    %98 = arith.mulf %97, %89 : vector<4x32xf32>
    %cst_68 = arith.constant 5.000000e-01 : f32
    %99 = vector.broadcast %cst_68 : f32 to vector<4x32xf32>
    %100 = arith.mulf %99, %95 : vector<4x32xf32>
    %101 = arith.mulf %100, %95 : vector<4x32xf32>
    %cst_69 = arith.constant -5.000000e-01 : f32
    %102 = vector.broadcast %cst_69 : f32 to vector<4x32xf32>
    %103 = arith.mulf %102, %98 : vector<4x32xf32>
    %104 = math.exp %103 : vector<4x32xf32>
    %105 = arith.mulf %101, %104 : vector<4x32xf32>
    %cst_70 = arith.constant 2.500000e-01 : f32
    %106 = vector.broadcast %cst_70 : f32 to vector<4x32xf32>
    %107 = arith.mulf %106, %98 : vector<4x32xf32>
    %108 = arith.addf %105, %107 : vector<4x32xf32>
    %c2_i32 = arith.constant 2 : i32
    %109 = arith.addi %5, %c2_i32 : i32
    %c6_i32_71 = arith.constant 6 : i32
    %110 = arith.cmpi slt, %109, %c6_i32_71 : i32
    %cst_72 = arith.constant 0.000000e+00 : f32
    %111 = vector.broadcast %cst_72 : f32 to vector<4x32xf32>
    %112 = arith.select %110, %108, %111 : vector<4x32xf32>
    %113 = arith.addf %87, %112 : vector<4x32xf32>
    %c0_73 = arith.constant 0 : index
    %c3 = arith.constant 3 : index
    %c0_74 = arith.constant 0 : index
    %114 = vector.load %arg5[%c0_73, %c3, %c0_74] : memref<4x6x32xf32, #tpu.memory_space<vmem>>, vector<4x1x32xf32>
    %115 = vector.shape_cast %114 : vector<4x1x32xf32> to vector<4x32xf32>
    %c3_75 = arith.constant 3 : index
    %c0_76 = arith.constant 0 : index
    %c0_77 = arith.constant 0 : index
    %116 = vector.load %arg2[%c3_75, %c0_76, %c0_77] : memref<6x4x32xf32, #tpu.memory_space<vmem>>, vector<1x4x32xf32>
    %117 = vector.shape_cast %116 : vector<1x4x32xf32> to vector<4x32xf32>
    %c3_78 = arith.constant 3 : index
    %c0_79 = arith.constant 0 : index
    %c0_80 = arith.constant 0 : index
    %118 = vector.load %arg3[%c3_78, %c0_79, %c0_80] : memref<6x4x32xf32, #tpu.memory_space<vmem>>, vector<1x4x32xf32>
    %119 = vector.shape_cast %118 : vector<1x4x32xf32> to vector<4x32xf32>
    %120 = arith.subf %117, %119 : vector<4x32xf32>
    %121 = arith.mulf %120, %115 : vector<4x32xf32>
    %c3_81 = arith.constant 3 : index
    %c0_82 = arith.constant 0 : index
    %c0_83 = arith.constant 0 : index
    %122 = vector.load %arg4[%c3_81, %c0_82, %c0_83] : memref<6x4x32xf32, #tpu.memory_space<vmem>>, vector<1x4x32xf32>
    %123 = vector.shape_cast %122 : vector<1x4x32xf32> to vector<4x32xf32>
    %124 = arith.mulf %123, %115 : vector<4x32xf32>
    %cst_84 = arith.constant 5.000000e-01 : f32
    %125 = vector.broadcast %cst_84 : f32 to vector<4x32xf32>
    %126 = arith.mulf %125, %121 : vector<4x32xf32>
    %127 = arith.mulf %126, %121 : vector<4x32xf32>
    %cst_85 = arith.constant -5.000000e-01 : f32
    %128 = vector.broadcast %cst_85 : f32 to vector<4x32xf32>
    %129 = arith.mulf %128, %124 : vector<4x32xf32>
    %130 = math.exp %129 : vector<4x32xf32>
    %131 = arith.mulf %127, %130 : vector<4x32xf32>
    %cst_86 = arith.constant 2.500000e-01 : f32
    %132 = vector.broadcast %cst_86 : f32 to vector<4x32xf32>
    %133 = arith.mulf %132, %124 : vector<4x32xf32>
    %134 = arith.addf %131, %133 : vector<4x32xf32>
    %c3_i32 = arith.constant 3 : i32
    %135 = arith.addi %5, %c3_i32 : i32
    %c6_i32_87 = arith.constant 6 : i32
    %136 = arith.cmpi slt, %135, %c6_i32_87 : i32
    %cst_88 = arith.constant 0.000000e+00 : f32
    %137 = vector.broadcast %cst_88 : f32 to vector<4x32xf32>
    %138 = arith.select %136, %134, %137 : vector<4x32xf32>
    %139 = arith.addf %113, %138 : vector<4x32xf32>
    %c0_89 = arith.constant 0 : index
    %c4 = arith.constant 4 : index
    %c0_90 = arith.constant 0 : index
    %140 = vector.load %arg5[%c0_89, %c4, %c0_90] : memref<4x6x32xf32, #tpu.memory_space<vmem>>, vector<4x1x32xf32>
    %141 = vector.shape_cast %140 : vector<4x1x32xf32> to vector<4x32xf32>
    %c4_91 = arith.constant 4 : index
    %c0_92 = arith.constant 0 : index
    %c0_93 = arith.constant 0 : index
    %142 = vector.load %arg2[%c4_91, %c0_92, %c0_93] : memref<6x4x32xf32, #tpu.memory_space<vmem>>, vector<1x4x32xf32>
    %143 = vector.shape_cast %142 : vector<1x4x32xf32> to vector<4x32xf32>
    %c4_94 = arith.constant 4 : index
    %c0_95 = arith.constant 0 : index
    %c0_96 = arith.constant 0 : index
    %144 = vector.load %arg3[%c4_94, %c0_95, %c0_96] : memref<6x4x32xf32, #tpu.memory_space<vmem>>, vector<1x4x32xf32>
    %145 = vector.shape_cast %144 : vector<1x4x32xf32> to vector<4x32xf32>
    %146 = arith.subf %143, %145 : vector<4x32xf32>
    %147 = arith.mulf %146, %141 : vector<4x32xf32>
    %c4_97 = arith.constant 4 : index
    %c0_98 = arith.constant 0 : index
    %c0_99 = arith.constant 0 : index
    %148 = vector.load %arg4[%c4_97, %c0_98, %c0_99] : memref<6x4x32xf32, #tpu.memory_space<vmem>>, vector<1x4x32xf32>
    %149 = vector.shape_cast %148 : vector<1x4x32xf32> to vector<4x32xf32>
    %150 = arith.mulf %149, %141 : vector<4x32xf32>
    %cst_100 = arith.constant 5.000000e-01 : f32
    %151 = vector.broadcast %cst_100 : f32 to vector<4x32xf32>
    %152 = arith.mulf %151, %147 : vector<4x32xf32>
    %153 = arith.mulf %152, %147 : vector<4x32xf32>
    %cst_101 = arith.constant -5.000000e-01 : f32
    %154 = vector.broadcast %cst_101 : f32 to vector<4x32xf32>
    %155 = arith.mulf %154, %150 : vector<4x32xf32>
    %156 = math.exp %155 : vector<4x32xf32>
    %157 = arith.mulf %153, %156 : vector<4x32xf32>
    %cst_102 = arith.constant 2.500000e-01 : f32
    %158 = vector.broadcast %cst_102 : f32 to vector<4x32xf32>
    %159 = arith.mulf %158, %150 : vector<4x32xf32>
    %160 = arith.addf %157, %159 : vector<4x32xf32>
    %c4_i32 = arith.constant 4 : i32
    %161 = arith.addi %5, %c4_i32 : i32
    %c6_i32_103 = arith.constant 6 : i32
    %162 = arith.cmpi slt, %161, %c6_i32_103 : i32
    %cst_104 = arith.constant 0.000000e+00 : f32
    %163 = vector.broadcast %cst_104 : f32 to vector<4x32xf32>
    %164 = arith.select %162, %160, %163 : vector<4x32xf32>
    %165 = arith.addf %139, %164 : vector<4x32xf32>
    %c0_105 = arith.constant 0 : index
    %c5 = arith.constant 5 : index
    %c0_106 = arith.constant 0 : index
    %166 = vector.load %arg5[%c0_105, %c5, %c0_106] : memref<4x6x32xf32, #tpu.memory_space<vmem>>, vector<4x1x32xf32>
    %167 = vector.shape_cast %166 : vector<4x1x32xf32> to vector<4x32xf32>
    %c5_107 = arith.constant 5 : index
    %c0_108 = arith.constant 0 : index
    %c0_109 = arith.constant 0 : index
    %168 = vector.load %arg2[%c5_107, %c0_108, %c0_109] : memref<6x4x32xf32, #tpu.memory_space<vmem>>, vector<1x4x32xf32>
    %169 = vector.shape_cast %168 : vector<1x4x32xf32> to vector<4x32xf32>
    %c5_110 = arith.constant 5 : index
    %c0_111 = arith.constant 0 : index
    %c0_112 = arith.constant 0 : index
    %170 = vector.load %arg3[%c5_110, %c0_111, %c0_112] : memref<6x4x32xf32, #tpu.memory_space<vmem>>, vector<1x4x32xf32>
    %171 = vector.shape_cast %170 : vector<1x4x32xf32> to vector<4x32xf32>
    %172 = arith.subf %169, %171 : vector<4x32xf32>
    %173 = arith.mulf %172, %167 : vector<4x32xf32>
    %c5_113 = arith.constant 5 : index
    %c0_114 = arith.constant 0 : index
    %c0_115 = arith.constant 0 : index
    %174 = vector.load %arg4[%c5_113, %c0_114, %c0_115] : memref<6x4x32xf32, #tpu.memory_space<vmem>>, vector<1x4x32xf32>
    %175 = vector.shape_cast %174 : vector<1x4x32xf32> to vector<4x32xf32>
    %176 = arith.mulf %175, %167 : vector<4x32xf32>
    %cst_116 = arith.constant 5.000000e-01 : f32
    %177 = vector.broadcast %cst_116 : f32 to vector<4x32xf32>
    %178 = arith.mulf %177, %173 : vector<4x32xf32>
    %179 = arith.mulf %178, %173 : vector<4x32xf32>
    %cst_117 = arith.constant -5.000000e-01 : f32
    %180 = vector.broadcast %cst_117 : f32 to vector<4x32xf32>
    %181 = arith.mulf %180, %176 : vector<4x32xf32>
    %182 = math.exp %181 : vector<4x32xf32>
    %183 = arith.mulf %179, %182 : vector<4x32xf32>
    %cst_118 = arith.constant 2.500000e-01 : f32
    %184 = vector.broadcast %cst_118 : f32 to vector<4x32xf32>
    %185 = arith.mulf %184, %176 : vector<4x32xf32>
    %186 = arith.addf %183, %185 : vector<4x32xf32>
    %c5_i32 = arith.constant 5 : i32
    %187 = arith.addi %5, %c5_i32 : i32
    %c6_i32_119 = arith.constant 6 : i32
    %188 = arith.cmpi slt, %187, %c6_i32_119 : i32
    %cst_120 = arith.constant 0.000000e+00 : f32
    %189 = vector.broadcast %cst_120 : f32 to vector<4x32xf32>
    %190 = arith.select %188, %186, %189 : vector<4x32xf32>
    %191 = arith.addf %165, %190 : vector<4x32xf32>
    %c0_121 = arith.constant 0 : index
    %c0_122 = arith.constant 0 : index
    %192 = vector.load %arg13[%c0_121, %c0_122] : memref<4x32xf32, #tpu.memory_space<vmem>>, vector<4x32xf32>
    %193 = arith.addf %192, %191 : vector<4x32xf32>
    %c0_123 = arith.constant 0 : index
    %c0_124 = arith.constant 0 : index
    %194 = vector.load %arg13[%c0_123, %c0_124] : memref<4x32xf32, #tpu.memory_space<vmem>>, vector<4x32xf32>
    tpu.vector_store %arg13[%c0_123, %c0_124], %193 {strides = array<i32>} : memref<4x32xf32, #tpu.memory_space<vmem>>, vector<4x32xf32>,
    %c0_i32_125 = arith.constant 0 : i32
    %195 = arith.cmpi eq, %arg1, %c0_i32_125 : i32
    %196 = arith.extui %195 : i1 to i32
    %c0_i32_126 = arith.constant 0 : i32
    %197 = arith.cmpi ne, %196, %c0_i32_126 : i32
    scf.if %197 {
      %c0_127 = arith.constant 0 : index
      %c0_128 = arith.constant 0 : index
      %198 = vector.load %arg12[%c0_127, %c0_128] : memref<4x16xf32, #tpu.memory_space<vmem>>, vector<4x16xf32>
      %199 = vector.shape_cast %198 : vector<4x16xf32> to vector<1x4x16xf32>
      %cst_129 = arith.constant dense<0.000000e+00> : vector<1xf32>
      %200 = vector.multi_reduction <add>, %199, %cst_129 [1, 2] : vector<1x4x16xf32> to vector<1xf32>
      %201 = vector.shape_cast %200 : vector<1xf32> to vector<1x1x1xf32>
      %202 = vector.extract %201[0, 0, 0] : f32 from vector<1x1x1xf32>
      %203 = vector.broadcast %202 : f32 to vector<1x8x128xf32>
      %c0_130 = arith.constant 0 : index
      %c0_131 = arith.constant 0 : index
      %c0_132 = arith.constant 0 : index
      %204 = vector.load %arg10[%c0_130, %c0_131, %c0_132] : memref<1x8x128xf32, #tpu.memory_space<vmem>>, vector<1x8x128xf32>
      tpu.vector_store %arg10[%c0_130, %c0_131, %c0_132], %203 {strides = array<i32>} : memref<1x8x128xf32, #tpu.memory_space<vmem>>, vector<1x8x128xf32>,
      %c0_133 = arith.constant 0 : index
      %c0_134 = arith.constant 0 : index
      %205 = vector.load %arg13[%c0_133, %c0_134] : memref<4x32xf32, #tpu.memory_space<vmem>>, vector<4x32xf32>
      %206 = vector.shape_cast %205 : vector<4x32xf32> to vector<1x4x32xf32>
      %cst_135 = arith.constant dense<0.000000e+00> : vector<1xf32>
      %207 = vector.multi_reduction <add>, %206, %cst_135 [1, 2] : vector<1x4x32xf32> to vector<1xf32>
      %208 = vector.shape_cast %207 : vector<1xf32> to vector<1x1x1xf32>
      %209 = vector.extract %208[0, 0, 0] : f32 from vector<1x1x1xf32>
      %210 = vector.broadcast %209 : f32 to vector<1x8x128xf32>
      %c0_136 = arith.constant 0 : index
      %c0_137 = arith.constant 0 : index
      %c0_138 = arith.constant 0 : index
      %211 = vector.load %arg11[%c0_136, %c0_137, %c0_138] : memref<1x8x128xf32, #tpu.memory_space<vmem>>, vector<1x8x128xf32>
      tpu.vector_store %arg11[%c0_136, %c0_137, %c0_138], %210 {strides = array<i32>} : memref<1x8x128xf32, #tpu.memory_space<vmem>>, vector<1x8x128xf32>,
    } else {
    }
    return
  }
  func.func @transform_0(%arg0: i32, %arg1: i32) -> (i32, i32, i32) {
    %c1_i32 = arith.constant 1 : i32
    %0 = arith.muli %arg0, %c1_i32 : i32
    %1 = arith.addi %0, %arg1 : i32
    %c0_i32 = arith.constant 0 : i32
    %2 = arith.minsi %1, %c0_i32 : i32
    %c0_i32_0 = arith.constant 0 : i32
    %c0_i32_1 = arith.constant 0 : i32
    %c0_i32_2 = arith.constant 0 : i32
    return %2, %c0_i32_0, %c0_i32_1 : i32, i32, i32
  }
  func.func @transform_1(%arg0: i32, %arg1: i32) -> (i32, i32, i32) {
    %c1_i32 = arith.constant 1 : i32
    %0 = arith.muli %arg0, %c1_i32 : i32
    %1 = arith.addi %0, %arg1 : i32
    %c0_i32 = arith.constant 0 : i32
    %2 = arith.minsi %1, %c0_i32 : i32
    %c0_i32_0 = arith.constant 0 : i32
    %c0_i32_1 = arith.constant 0 : i32
    %c0_i32_2 = arith.constant 0 : i32
    return %2, %c0_i32_0, %c0_i32_1 : i32, i32, i32
  }
  func.func @transform_2(%arg0: i32, %arg1: i32) -> (i32, i32, i32) {
    %c1_i32 = arith.constant 1 : i32
    %0 = arith.muli %arg0, %c1_i32 : i32
    %1 = arith.addi %0, %arg1 : i32
    %c0_i32 = arith.constant 0 : i32
    %2 = arith.minsi %1, %c0_i32 : i32
    %c0_i32_0 = arith.constant 0 : i32
    %c0_i32_1 = arith.constant 0 : i32
    %c0_i32_2 = arith.constant 0 : i32
    return %2, %c0_i32_0, %c0_i32_1 : i32, i32, i32
  }
  func.func @transform_3(%arg0: i32, %arg1: i32) -> (i32, i32, i32) {
    %c1_i32 = arith.constant 1 : i32
    %0 = arith.muli %arg0, %c1_i32 : i32
    %1 = arith.addi %0, %arg1 : i32
    %c0_i32 = arith.constant 0 : i32
    %2 = arith.minsi %1, %c0_i32 : i32
    %c0_i32_0 = arith.constant 0 : i32
    %c0_i32_1 = arith.constant 0 : i32
    %c0_i32_2 = arith.constant 0 : i32
    return %c0_i32_0, %2, %c0_i32_1 : i32, i32, i32
  }
  func.func @transform_4(%arg0: i32, %arg1: i32) -> (i32, i32, i32) {
    %c1_i32 = arith.constant 1 : i32
    %0 = arith.muli %arg0, %c1_i32 : i32
    %1 = arith.addi %0, %arg1 : i32
    %c0_i32 = arith.constant 0 : i32
    %2 = arith.minsi %1, %c0_i32 : i32
    %c0_i32_0 = arith.constant 0 : i32
    %c0_i32_1 = arith.constant 0 : i32
    %c0_i32_2 = arith.constant 0 : i32
    return %2, %c0_i32_0, %c0_i32_1 : i32, i32, i32
  }
  func.func @transform_5(%arg0: i32, %arg1: i32) -> (i32, i32, i32) {
    %c1_i32 = arith.constant 1 : i32
    %0 = arith.muli %arg0, %c1_i32 : i32
    %1 = arith.addi %0, %arg1 : i32
    %c0_i32 = arith.constant 0 : i32
    %2 = arith.minsi %1, %c0_i32 : i32
    %c0_i32_0 = arith.constant 0 : i32
    %c0_i32_1 = arith.constant 0 : i32
    %c0_i32_2 = arith.constant 0 : i32
    return %2, %c0_i32_0, %c0_i32_1 : i32, i32, i32
  }
  func.func @transform_6(%arg0: i32, %arg1: i32) -> (i32, i32, i32) {
    %c1_i32 = arith.constant 1 : i32
    %0 = arith.muli %arg0, %c1_i32 : i32
    %1 = arith.addi %0, %arg1 : i32
    %c0_i32 = arith.constant 0 : i32
    %2 = arith.minsi %1, %c0_i32 : i32
    %c0_i32_0 = arith.constant 0 : i32
    %c0_i32_1 = arith.constant 0 : i32
    %c0_i32_2 = arith.constant 0 : i32
    return %2, %c0_i32_0, %c0_i32_1 : i32, i32, i32
  }
  func.func @transform_7(%arg0: i32, %arg1: i32) -> (i32, i32, i32) {
    %c1_i32 = arith.constant 1 : i32
    %0 = arith.muli %arg0, %c1_i32 : i32
    %1 = arith.addi %0, %arg1 : i32
    %c0_i32 = arith.constant 0 : i32
    %2 = arith.minsi %1, %c0_i32 : i32
    %c0_i32_0 = arith.constant 0 : i32
    %c0_i32_1 = arith.constant 0 : i32
    %c0_i32_2 = arith.constant 0 : i32
    return %2, %c0_i32_0, %c0_i32_1 : i32, i32, i32
  }
  func.func @transform_8(%arg0: i32, %arg1: i32) -> (i32, i32, i32) {
    %c0_i32 = arith.constant 0 : i32
    %c0_i32_0 = arith.constant 0 : i32
    %c0_i32_1 = arith.constant 0 : i32
    return %arg0, %c0_i32, %c0_i32_0 : i32, i32, i32
  }
  func.func @transform_9(%arg0: i32, %arg1: i32) -> (i32, i32, i32) {
    %c0_i32 = arith.constant 0 : i32
    %c0_i32_0 = arith.constant 0 : i32
    %c0_i32_1 = arith.constant 0 : i32
    return %arg0, %c0_i32, %c0_i32_0 : i32, i32, i32
  }
}

</mosaic_0001>

<llo_original>
// kernel: tpu_custom_call.1
$region0: #{tpu_custom_call.1}
  #allocation0 [shape = 'u32[]', space=smem, size = 0x4, offset = 0x4, fixed_abs, tag = 'smem constant byte address 0x4 - core index']
  #allocation1 [shape = 'u32[144,128]{1,0:T(1,128)}', space=vmem, size = 0x12000, scoped, tag = 'internal scratch']
  #allocation2 [shape = 'f32[4,16]{1,0:T(4,128)}', space=vmem, size = 0x800, scoped, tag = 'scratch operand']
  #allocation3 [shape = 'f32[4,32]{1,0:T(4,128)}', space=vmem, size = 0x800, scoped, tag = 'scratch operand']
  %s0 = inlined_call_operand.vmem [shape: f32[6,4,32], index: 0, kind: input, shape index: {}]
  %s1 = inlined_call_operand.vmem [shape: f32[6,4,32], index: 1, kind: input, shape index: {}]
  %s2 = inlined_call_operand.hbm [shape: f32[6,4,32], index: 2, kind: input, shape index: {}]
  %s3 = inlined_call_operand.vmem [shape: f32[4,6,32], index: 3, kind: input, shape index: {}]
  %s4 = inlined_call_operand.hbm [shape: f32[6,4,16], index: 4, kind: input, shape index: {}]
  %s5 = inlined_call_operand.vmem [shape: f32[6,4,16], index: 5, kind: input, shape index: {}]
  %s6 = inlined_call_operand.hbm [shape: f32[6,4,16], index: 6, kind: input, shape index: {}]
  %s7 = inlined_call_operand.hbm [shape: f32[6,4,16], index: 7, kind: input, shape index: {}]
  %s8 = inlined_call_operand.hbm [shape: f32[1,8,128], index: 8, kind: output, shape index: {0}]
  %s9 = inlined_call_operand.hbm [shape: f32[1,8,128], index: 9, kind: output, shape index: {1}]
  %10 = xla_tuple %s8, %s9
  %s11 = sld [smem:[#allocation0]]
  $region74: #{tpu_custom_call.1} parent=0
    _
  %s13 = ssub.s32 1, %s11
  %s14 = scalar_select 0, %s13, %s11
  $region1: #{tpu_custom_call.1} parent=0
    #allocation4 [shape = 'u8[12288]{0}', space=vmem, size = 0x3000, scoped, tag = 'input window, operand 2, single buffered']
    #allocation5 [shape = 's32[1]{0}', space=sflag, size = 0x4, scoped, tag = 'scoped memory for tpu_custom_call.1']
    #allocation6 [shape = 's32[1]{0}', space=sflag, size = 0x4, scoped, tag = 'scoped memory for tpu_custom_call.1']
    #allocation7 [shape = 'u8[12288]{0}', space=vmem, size = 0x3000, scoped, tag = 'input window, operand 4, single buffered']
    #allocation8 [shape = 's32[1]{0}', space=sflag, size = 0x4, scoped, tag = 'scoped memory for tpu_custom_call.1']
    #allocation9 [shape = 'u8[12288]{0}', space=vmem, size = 0x3000, scoped, tag = 'input window, operand 6, single buffered']
    #allocation10 [shape = 'u8[12288]{0}', space=vmem, size = 0x3000, scoped, tag = 'input window, operand 7, single buffered']
    #allocation11 [shape = 's32[1]{0}', space=sflag, size = 0x4, scoped, tag = 'scoped memory for tpu_custom_call.1']
    #allocation12 [shape = 'u8[4096]{0}', space=vmem, size = 0x1000, scoped, tag = 'output window, operand 0, single buffered']
    #allocation13 [shape = 'u8[4096]{0}', space=vmem, size = 0x1000, scoped, tag = 'output window, operand 1, single buffered']
    #allocation14 [shape = 's32[1]{0}', space=sflag, size = 0x4, scoped, tag = 'scoped memory for tpu_custom_call.1']
    %15 = vsyncpa [#allocation5], 0
    %16 = vsyncpa [#allocation8], 0
    %17 = vsyncpa [#allocation11], 0
    %18 = vsyncpa [#allocation6], 0
    %19 = vsyncpa [#allocation14], 0
    // Predicated region
    $region2: #{tpu_custom_call.1} parent=1 // pred_check
      _
    $region3: #{tpu_custom_call.1} parent=1 // pred_check_branch
      %21 = sbr.rel (0) target = $region5
    $region4: #{tpu_custom_call.1} parent=1 // pred_region
      %s22 = sadd.s32 0, 0
      %p23 = scmp.lt.s32.totalorder %s22, 0
      %s24 = scalar_select %p23, %s22, 0
      %s25 = smul.u32 6, %s24
      %p26 = scmp.lt.s32.totalorder %s25, 5
      %s27 = scalar_select %p26, %s25, 5
      %s28 = smul.addr %s27, 4
      %s29 = scalar_lea.vmem %s0, %s28
      %s30 = sadd.s32 0, 0
      %p31 = scmp.lt.s32.totalorder %s30, 0
      %s32 = scalar_select %p31, %s30, 0
      %s33 = smul.u32 6, %s32
    $region5: #{tpu_custom_call.1} parent=1 // pred_fallthru
      _
    // Predicated region
    $region6: #{tpu_custom_call.1} parent=1 // pred_check
      _
    $region7: #{tpu_custom_call.1} parent=1 // pred_check_branch
      %35 = sbr.rel (0) target = $region9
    $region8: #{tpu_custom_call.1} parent=1 // pred_region
      %s36 = sadd.s32 0, 0
      %p37 = scmp.lt.s32.totalorder %s36, 0
      %s38 = scalar_select %p37, %s36, 0
      %s39 = smul.u32 6, %s38
      %p40 = scmp.lt.s32.totalorder %s39, 5
      %s41 = scalar_select %p40, %s39, 5
      %s42 = smul.addr %s41, 4
      %s43 = scalar_lea.vmem %s1, %s42
      %s44 = sadd.s32 0, 0
      %p45 = scmp.lt.s32.totalorder %s44, 0
      %s46 = scalar_select %p45, %s44, 0
      %s47 = smul.u32 6, %s46
    $region9: #{tpu_custom_call.1} parent=1 // pred_fallthru
      _
    // Predicated region
    $region10: #{tpu_custom_call.1} parent=1 // pred_check
      _
    $region11: #{tpu_custom_call.1} parent=1 // pred_check_branch
      %49 = sbr.rel (0) target = $region13
    $region12: #{tpu_custom_call.1} parent=1 // pred_region
      %s50 = sadd.s32 0, 0
      %p51 = scmp.lt.s32.totalorder %s50, 0
      %s52 = scalar_select %p51, %s50, 0
      %s53 = smul.u32 6, %s52
      %s55 = ssub.s32 384, 384
      %56 = vsyncadd [#allocation5], %s55
      %s57 = smul.addr %s53, 64
      %s58 = scalar_lea.hbm %s2, %s57
      %s59 = sshll.u32 [#allocation4], 4
      %s60 = int_to_ptr.vmem [resolvable:$true] %s59
      %65 = dma.hbm_to_vmem [thread:$0]  %s58, 384, %s60, [#allocation5], 64, 64, 4
    $region13: #{tpu_custom_call.1} parent=1 // pred_fallthru
      _
    // Predicated region
    $region14: #{tpu_custom_call.1} parent=1 // pred_check
      _
    $region15: #{tpu_custom_call.1} parent=1 // pred_check_branch
      %67 = sbr.rel (0) target = $region17
    $region16: #{tpu_custom_call.1} parent=1 // pred_region
      %s68 = sadd.s32 0, 0
      %p69 = scmp.lt.s32.totalorder %s68, 0
      %s70 = scalar_select %p69, %s68, 0
      %p71 = scmp.lt.s32.totalorder %s70, 0
      %s72 = scalar_select %p71, %s70, 0
      %s73 = smul.addr %s72, 8
      %s74 = scalar_lea.vmem %s3, %s73
      %s75 = sadd.s32 0, 0
      %p76 = scmp.lt.s32.totalorder %s75, 0
      %s77 = scalar_select %p76, %s75, 0
    $region17: #{tpu_custom_call.1} parent=1 // pred_fallthru
      _
    // Predicated region
    $region18: #{tpu_custom_call.1} parent=1 // pred_check
      _
    $region19: #{tpu_custom_call.1} parent=1 // pred_check_branch
      %79 = sbr.rel (0) target = $region21
    $region20: #{tpu_custom_call.1} parent=1 // pred_region
      %s80 = sadd.s32 0, 0
      %p81 = scmp.lt.s32.totalorder %s80, 0
      %s82 = scalar_select %p81, %s80, 0
      %s83 = smul.u32 6, %s82
      %s85 = ssub.s32 384, 384
      %86 = vsyncadd [#allocation8], %s85
      %s87 = smul.addr %s83, 64
      %s88 = scalar_lea.hbm %s4, %s87
      %s89 = sshll.u32 [#allocation7], 4
      %s90 = int_to_ptr.vmem [resolvable:$true] %s89
      %95 = dma.hbm_to_vmem [thread:$0]  %s88, 384, %s90, [#allocation8], 64, 64, 4
    $region21: #{tpu_custom_call.1} parent=1 // pred_fallthru
      _
    // Predicated region
    $region22: #{tpu_custom_call.1} parent=1 // pred_check
      _
    $region23: #{tpu_custom_call.1} parent=1 // pred_check_branch
      %97 = sbr.rel (0) target = $region25
    $region24: #{tpu_custom_call.1} parent=1 // pred_region
      %s98 = sadd.s32 0, 0
      %p99 = scmp.lt.s32.totalorder %s98, 0
      %s100 = scalar_select %p99, %s98, 0
      %s101 = smul.u32 6, %s100
      %p102 = scmp.lt.s32.totalorder %s101, 5
      %s103 = scalar_select %p102, %s101, 5
      %s104 = smul.addr %s103, 4
      %s105 = scalar_lea.vmem %s5, %s104
      %s106 = sadd.s32 0, 0
      %p107 = scmp.lt.s32.totalorder %s106, 0
      %s108 = scalar_select %p107, %s106, 0
      %s109 = smul.u32 6, %s108
    $region25: #{tpu_custom_call.1} parent=1 // pred_fallthru
      _
    // Predicated region
    $region26: #{tpu_custom_call.1} parent=1 // pred_check
      _
    $region27: #{tpu_custom_call.1} parent=1 // pred_check_branch
      %111 = sbr.rel (0) target = $region29
    $region28: #{tpu_custom_call.1} parent=1 // pred_region
      %s112 = sadd.s32 0, 0
      %p113 = scmp.lt.s32.totalorder %s112, 0
      %s114 = scalar_select %p113, %s112, 0
      %s115 = smul.u32 6, %s114
      %s117 = ssub.s32 384, 384
      %118 = vsyncadd [#allocation8], %s117
      %s119 = smul.addr %s115, 64
      %s120 = scalar_lea.hbm %s6, %s119
      %s121 = sshll.u32 [#allocation9], 4
      %s122 = int_to_ptr.vmem [resolvable:$true] %s121
      %127 = dma.hbm_to_vmem [thread:$0]  %s120, 384, %s122, [#allocation8], 64, 64, 4
    $region29: #{tpu_custom_call.1} parent=1 // pred_fallthru
      _
    // Predicated region
    $region30: #{tpu_custom_call.1} parent=1 // pred_check
      _
    $region31: #{tpu_custom_call.1} parent=1 // pred_check_branch
      %129 = sbr.rel (0) target = $region33
    $region32: #{tpu_custom_call.1} parent=1 // pred_region
      %s130 = sadd.s32 0, 0
      %p131 = scmp.lt.s32.totalorder %s130, 0
      %s132 = scalar_select %p131, %s130, 0
      %s133 = smul.u32 6, %s132
      %s135 = ssub.s32 384, 384
      %136 = vsyncadd [#allocation11], %s135
      %s137 = smul.addr %s133, 64
      %s138 = scalar_lea.hbm %s7, %s137
      %s139 = sshll.u32 [#allocation10], 4
      %s140 = int_to_ptr.vmem [resolvable:$true] %s139
      %145 = dma.hbm_to_vmem [thread:$0]  %s138, 384, %s140, [#allocation11], 64, 64, 4
    $region33: #{tpu_custom_call.1} parent=1 // pred_fallthru
      _
    // Predicated region
    $region34: #{tpu_custom_call.1} parent=1 // pred_check
      _
    $region35: #{tpu_custom_call.1} parent=1 // pred_check_branch
      %147 = sbr.rel (0) target = $region37
    $region36: #{tpu_custom_call.1} parent=1 // pred_region
      %148 = dma.done [#allocation5], 384
    $region37: #{tpu_custom_call.1} parent=1 // pred_fallthru
      _
    // Predicated region
    $region38: #{tpu_custom_call.1} parent=1 // pred_check
      _
    $region39: #{tpu_custom_call.1} parent=1 // pred_check_branch
      %150 = sbr.rel (0) target = $region41
    $region40: #{tpu_custom_call.1} parent=1 // pred_region
      %151 = dma.done [#allocation8], 384
    $region41: #{tpu_custom_call.1} parent=1 // pred_fallthru
      _
    // Predicated region
    $region42: #{tpu_custom_call.1} parent=1 // pred_check
      _
    $region43: #{tpu_custom_call.1} parent=1 // pred_check_branch
      %153 = sbr.rel (0) target = $region45
    $region44: #{tpu_custom_call.1} parent=1 // pred_region
      %154 = dma.done [#allocation8], 384
    $region45: #{tpu_custom_call.1} parent=1 // pred_fallthru
      _
    // Predicated region
    $region46: #{tpu_custom_call.1} parent=1 // pred_check
      _
    $region47: #{tpu_custom_call.1} parent=1 // pred_check_branch
      %156 = sbr.rel (0) target = $region49
    $region48: #{tpu_custom_call.1} parent=1 // pred_region
      %157 = dma.done [#allocation11], 384
    $region49: #{tpu_custom_call.1} parent=1 // pred_fallthru
      _
    %s158 = sadd.s32 0, 0
    %p159 = scmp.lt.s32.totalorder %s158, 0
    %s160 = scalar_select %p159, %s158, 0
    %s161 = smul.u32 6, %s160
    %p162 = scmp.lt.s32.totalorder %s161, 5
    %s163 = scalar_select %p162, %s161, 5
    %s164 = smul.addr %s163, 4
    %s165 = scalar_lea.vmem %s0, %s164
    %s166 = sadd.s32 0, 0
    %p167 = scmp.lt.s32.totalorder %s166, 0
    %s168 = scalar_select %p167, %s166, 0
    %s169 = smul.u32 6, %s168
    %p170 = scmp.lt.s32.totalorder %s169, 5
    %s171 = scalar_select %p170, %s169, 5
    %s172 = smul.addr %s171, 4
    %s173 = scalar_lea.vmem %s1, %s172
    %s174 = sadd.s32 0, 0
    %p175 = scmp.lt.s32.totalorder %s174, 0
    %s176 = scalar_select %p175, %s174, 0
    %p177 = scmp.lt.s32.totalorder %s176, 0
    %s178 = scalar_select %p177, %s176, 0
    %s179 = smul.addr %s178, 8
    %s180 = scalar_lea.vmem %s3, %s179
    %s181 = sadd.s32 0, 0
    %p182 = scmp.lt.s32.totalorder %s181, 0
    %s183 = scalar_select %p182, %s181, 0
    %s184 = smul.u32 6, %s183
    %p185 = scmp.lt.s32.totalorder %s184, 5
    %s186 = scalar_select %p185, %s184, 5
    %s187 = smul.addr %s186, 4
    %s188 = scalar_lea.vmem %s5, %s187
    %s189 = sadd.s32 0, 0
    %p190 = scmp.lt.s32.totalorder %s189, 0
    %s191 = scalar_select %p190, %s189, 0
    %s192 = smul.u32 6, %s191
    %p193 = scmp.lt.s32.totalorder %s192, 5
    %s194 = scalar_select %p193, %s192, 5
    %s195 = smul.addr %s194, 4
    %s196 = scalar_lea.vmem %s0, %s195
    %s197 = sadd.s32 0, 0
    %p198 = scmp.lt.s32.totalorder %s197, 0
    %s199 = scalar_select %p198, %s197, 0
    %s200 = smul.u32 6, %s199
    %s201 = sadd.s32 0, 0
    %p202 = scmp.lt.s32.totalorder %s201, 0
    %s203 = scalar_select %p202, %s201, 0
    %s204 = smul.u32 6, %s203
    %p205 = scmp.lt.s32.totalorder %s204, 5
    %s206 = scalar_select %p205, %s204, 5
    %s207 = smul.addr %s206, 4
    %s208 = scalar_lea.vmem %s1, %s207
    %s209 = sadd.s32 0, 0
    %p210 = scmp.lt.s32.totalorder %s209, 0
    %s211 = scalar_select %p210, %s209, 0
    %s212 = smul.u32 6, %s211
    %s213 = sadd.s32 0, 0
    %p214 = scmp.lt.s32.totalorder %s213, 0
    %s215 = scalar_select %p214, %s213, 0
    %s216 = smul.u32 6, %s215
    %s217 = sadd.s32 0, 0
    %p218 = scmp.lt.s32.totalorder %s217, 0
    %s219 = scalar_select %p218, %s217, 0
    %p220 = scmp.lt.s32.totalorder %s219, 0
    %s221 = scalar_select %p220, %s219, 0
    %s222 = smul.addr %s221, 8
    %s223 = scalar_lea.vmem %s3, %s222
    %s224 = sadd.s32 0, 0
    %p225 = scmp.lt.s32.totalorder %s224, 0
    %s226 = scalar_select %p225, %s224, 0
    %s227 = sadd.s32 0, 0
    %p228 = scmp.lt.s32.totalorder %s227, 0
    %s229 = scalar_select %p228, %s227, 0
    %s230 = smul.u32 6, %s229
    %s231 = sadd.s32 0, 0
    %p232 = scmp.lt.s32.totalorder %s231, 0
    %s233 = scalar_select %p232, %s231, 0
    %s234 = smul.u32 6, %s233
    %p235 = scmp.lt.s32.totalorder %s234, 5
    %s236 = scalar_select %p235, %s234, 5
    %s237 = smul.addr %s236, 4
    %s238 = scalar_lea.vmem %s5, %s237
    %s239 = sadd.s32 0, 0
    %p240 = scmp.lt.s32.totalorder %s239, 0
    %s241 = scalar_select %p240, %s239, 0
    %s242 = smul.u32 6, %s241
    %s243 = sadd.s32 0, 0
    %p244 = scmp.lt.s32.totalorder %s243, 0
    %s245 = scalar_select %p244, %s243, 0
    %s246 = smul.u32 6, %s245
    %s247 = sadd.s32 0, 0
    %p248 = scmp.lt.s32.totalorder %s247, 0
    %s249 = scalar_select %p248, %s247, 0
    %s250 = smul.u32 6, %s249
    %p251 = scmp.eq.s32.totalorder 0, 0
    // Predicated region
    $region50: #{tpu_custom_call.1} parent=1 // pred_check
      %p252 = pneg %p251
    $region51: #{tpu_custom_call.1} parent=1 // pred_check_branch
      %254 = sbr.rel (%p252) target = $region53
    $region52: #{tpu_custom_call.1} parent=1 // pred_region
      %vm255 = vcmask 125952
      %256 = vst.msk [vmem:[#allocation2] sm:$0xf] %vm255, 0.0
      %vm257 = vcmask 257024
      %258 = vst.msk [vmem:[#allocation3] sm:$0xf] %vm257, 0.0
    $region53: #{tpu_custom_call.1} parent=1 // pred_fallthru
      _
    %s259 = sadd.s32 0, 0
    %s260 = smul.u32 %s259, 6
    %v261 = vld [vmem:[%s238] sm:$0xf]
    %v262 = vld [vmem:[%s238 + $0x4] sm:$0xf]
    %v263 = vld [vmem:[%s238 + $0x8] sm:$0xf]
    %v264 = vld [vmem:[%s238 + $0xc] sm:$0xf]
    %v265 = vld [vmem:[%s238 + $0x10] sm:$0xf]
    %v266 = vld [vmem:[%s238 + $0x14] sm:$0xf]
    %v267 = vld [vmem:[#allocation10] sm:$0xf]
    %v268 = vld [vmem:[#allocation10 + $0x4] sm:$0xf]
    %v269 = vld [vmem:[#allocation10 + $0x8] sm:$0xf]
    %v270 = vld [vmem:[#allocation10 + $0xc] sm:$0xf]
    %v271 = vld [vmem:[#allocation10 + $0x10] sm:$0xf]
    %v272 = vld [vmem:[#allocation10 + $0x14] sm:$0xf]
    %v273 = vld [vmem:[#allocation7] sm:$0xf]
    %v274 = vld [vmem:[#allocation7 + $0x4] sm:$0xf]
    %v275 = vld [vmem:[#allocation7 + $0x8] sm:$0xf]
    %v276 = vld [vmem:[#allocation7 + $0xc] sm:$0xf]
    %v277 = vld [vmem:[#allocation7 + $0x10] sm:$0xf]
    %v278 = vld [vmem:[#allocation7 + $0x14] sm:$0xf]
    %v279 = vld [vmem:[#allocation9] sm:$0xf]
    %v280 = vld [vmem:[#allocation9 + $0x4] sm:$0xf]
    %v281 = vld [vmem:[#allocation9 + $0x8] sm:$0xf]
    %v282 = vld [vmem:[#allocation9 + $0xc] sm:$0xf]
    %v283 = vld [vmem:[#allocation9 + $0x10] sm:$0xf]
    %v284 = vld [vmem:[#allocation9 + $0x14] sm:$0xf]
    %v285 = vsub.f32 %v273, %v279
    %v286 = vsub.f32 %v274, %v280
    %v287 = vsub.f32 %v275, %v281
    %v288 = vsub.f32 %v276, %v282
    %v289 = vsub.f32 %v277, %v283
    %v290 = vsub.f32 %v278, %v284
    %v291 = vsub.f32 %v267, %v261
    %v292 = vsub.f32 %v268, %v262
    %v293 = vsub.f32 %v269, %v263
    %v294 = vsub.f32 %v270, %v264
    %v295 = vsub.f32 %v271, %v265
    %v296 = vsub.f32 %v272, %v266
    %v297 = vmul.f32 %v261, 1.442695
    %v298 = vpow.pop %v297
    %v299 = vmul.f32 %v262, 1.442695
    %v300 = vpow.pop %v299
    %v301 = vmul.f32 %v263, 1.442695
    %v302 = vpow.pop %v301
    %v303 = vmul.f32 %v264, 1.442695
    %v304 = vpow.pop %v303
    %v305 = vmul.f32 %v265, 1.442695
    %v306 = vpow.pop %v305
    %v307 = vmul.f32 %v266, 1.442695
    %v308 = vpow.pop %v307
    %v309 = vmul.f32 %v285, %v285
    %v310 = vmul.f32 %v286, %v286
    %v311 = vmul.f32 %v287, %v287
    %v312 = vmul.f32 %v288, %v288
    %v313 = vmul.f32 %v289, %v289
    %v314 = vmul.f32 %v290, %v290
    %v315 = vadd.f32 %v298, %v309
    %v316 = vadd.f32 %v300, %v310
    %v317 = vadd.f32 %v302, %v311
    %v318 = vadd.f32 %v304, %v312
    %v319 = vadd.f32 %v306, %v313
    %v320 = vadd.f32 %v308, %v314
    %v321 = vsub.f32 0.0, %v267
    %v322 = vsub.f32 0.0, %v268
    %v323 = vsub.f32 0.0, %v269
    %v324 = vsub.f32 0.0, %v270
    %v325 = vsub.f32 0.0, %v271
    %v326 = vsub.f32 0.0, %v272
    %v327 = vmul.f32 %v321, 1.442695
    %v328 = vpow.pop %v327
    %v329 = vmul.f32 %v322, 1.442695
    %v330 = vpow.pop %v329
    %v331 = vmul.f32 %v323, 1.442695
    %v332 = vpow.pop %v331
    %v333 = vmul.f32 %v324, 1.442695
    %v334 = vpow.pop %v333
    %v335 = vmul.f32 %v325, 1.442695
    %v336 = vpow.pop %v335
    %v337 = vmul.f32 %v326, 1.442695
    %v338 = vpow.pop %v337
    %v339 = vmul.f32 %v315, %v328
    %v340 = vmul.f32 %v316, %v330
    %v341 = vmul.f32 %v317, %v332
    %v342 = vmul.f32 %v318, %v334
    %v343 = vmul.f32 %v319, %v336
    %v344 = vmul.f32 %v320, %v338
    %v345 = vadd.f32 %v291, %v339
    %v346 = vadd.f32 %v292, %v340
    %v347 = vadd.f32 %v293, %v341
    %v348 = vadd.f32 %v294, %v342
    %v349 = vadd.f32 %v295, %v343
    %v350 = vadd.f32 %v296, %v344
    %v351 = vsub.f32 %v345, 1.0
    %v352 = vsub.f32 %v346, 1.0
    %v353 = vsub.f32 %v347, 1.0
    %v354 = vsub.f32 %v348, 1.0
    %v355 = vsub.f32 %v349, 1.0
    %v356 = vsub.f32 %v350, 1.0
    %v357 = vstv %s260
    %v358 = vadd.s32 %v357, 1
    %v359 = vadd.s32 %v357, 2
    %v360 = vadd.s32 %v357, 3
    %v361 = vadd.s32 %v357, 4
    %v362 = vadd.s32 %v357, 5
    %vm363 = vcmp.lt.s32.totalorder %v357, 6
    %vm364 = vcmp.lt.s32.totalorder %v358, 6
    %vm365 = vcmp.lt.s32.totalorder %v359, 6
    %vm366 = vcmp.lt.s32.totalorder %v360, 6
    %vm367 = vcmp.lt.s32.totalorder %v361, 6
    %vm368 = vcmp.lt.s32.totalorder %v362, 6
    %v369 = vsel %vm363, %v351, 0.0
    %v370 = vsel %vm364, %v352, 0.0
    %v371 = vsel %vm365, %v353, 0.0
    %v372 = vsel %vm366, %v354, 0.0
    %v373 = vsel %vm367, %v355, 0.0
    %v374 = vsel %vm368, %v356, 0.0
    %v375 = vld [vmem:[#allocation2] sm:$0xf]
    %vm376 = vcmask 125952
    %v377 = vsel %vm376, %v369, 0.0
    %v378 = vsel %vm376, %v370, 0.0
    %v379 = vadd.f32 %v377, %v378
    %v380 = vsel %vm376, %v371, 0.0
    %v381 = vadd.f32 %v379, %v380
    %v382 = vsel %vm376, %v372, 0.0
    %v383 = vadd.f32 %v381, %v382
    %v384 = vsel %vm376, %v373, 0.0
    %v385 = vadd.f32 %v383, %v384
    %v386 = vsel %vm376, %v374, 0.0
    %v387 = vadd.f32 %v385, %v386
    %v388 = vmul.f32 %v387, 0.5
    %v389 = vadd.f32 %v375, %v388
    %390 = vst.msk [vmem:[#allocation2] sm:$0xf] %vm376, %v389
    %v391 = vld [vmem:[%s223] sm:$0x1]
    %v392 = vld [vmem:[%s223 + $0x8] sm:$0x1]
    %v393 = vld [vmem:[%s223 + $0x10] sm:$0x1]
    %v394 = vld [vmem:[%s223 + $0x18] sm:$0x1]
    %v395 = vld [vmem:[%s196] sm:$0xf]
    %v396 = vld [vmem:[%s208] sm:$0xf]
    %v397 = vsub.f32 %v395, %v396
    %v402 = vrot.slane %v392, 7
    %vm403 = vcmask 1041409
    %v404 = vsel %vm403, %v402, %v391
    %v405 = vrot.slane %v393, 6
    %vm406 = vcmask 1042434
    %v407 = vsel %vm406, %v405, %v404
    %v408 = vrot.slane %v394, 5
    %vm409 = vcmask 1043459
    %v410 = vsel %vm409, %v408, %v407
    %v412 = vmul.f32 %v397, %v410
    %v413 = vld [vmem:[#allocation4] sm:$0xf]
    %v414 = vmul.f32 %v413, %v410
    %v415 = vmul.f32 %v412, 0.5
    %v416 = vmul.f32 %v415, %v412
    %v417 = vmul.f32 %v414, -0.5
    %v418 = vmul.f32 %v417, 1.442695
    %v419 = vpow.pop %v418
    %v420 = vmul.f32 %v416, %v419
    %v421 = vmul.f32 %v414, 0.25
    %v422 = vadd.f32 %v420, %v421
    %p423 = scmp.lt.s32.totalorder %s260, 6
    %s424 = scalar_select %p423, 1, 0
    %v425 = vstv %s424
    %vm426 = vcmp.eq.s32.totalorder %v425, 1
    %v427 = vsel %vm426, %v422, 0.0
    %v428 = vadd.f32 %v427, 0.0
    %v429 = vld [vmem:[%s223 + $0x1] sm:$0x1]
    %v430 = vld [vmem:[%s223 + $0x9] sm:$0x1]
    %v431 = vld [vmem:[%s223 + $0x11] sm:$0x1]
    %v432 = vld [vmem:[%s223 + $0x19] sm:$0x1]
    %s433 = scalar_lea.vmem %s196, 4
    %v434 = vld [vmem:[%s433] sm:$0xf]
    %s435 = scalar_lea.vmem %s208, 4
    %v436 = vld [vmem:[%s435] sm:$0xf]
    %v437 = vsub.f32 %v434, %v436
    %v442 = vrot.slane %v430, 7
    %v443 = vsel %vm403, %v442, %v429
    %v444 = vrot.slane %v431, 6
    %v445 = vsel %vm406, %v444, %v443
    %v446 = vrot.slane %v432, 5
    %v447 = vsel %vm409, %v446, %v445
    %v449 = vmul.f32 %v437, %v447
    %s450 = scalar_lea.vmem [#allocation4], 4
    %v451 = vld [vmem:[%s450] sm:$0xf]
    %v452 = vmul.f32 %v451, %v447
    %v453 = vmul.f32 %v449, 0.5
    %v454 = vmul.f32 %v453, %v449
    %v455 = vmul.f32 %v452, -0.5
    %v456 = vmul.f32 %v455, 1.442695
    %v457 = vpow.pop %v456
    %v458 = vmul.f32 %v454, %v457
    %v459 = vmul.f32 %v452, 0.25
    %v460 = vadd.f32 %v458, %v459
    %s461 = sadd.s32 %s260, 1
    %p462 = scmp.lt.s32.totalorder %s461, 6
    %s463 = scalar_select %p462, 1, 0
    %v464 = vstv %s463
    %vm465 = vcmp.eq.s32.totalorder %v464, 1
    %v466 = vsel %vm465, %v460, 0.0
    %v467 = vadd.f32 %v428, %v466
    %v468 = vld [vmem:[%s223 + $0x2] sm:$0x1]
    %v469 = vld [vmem:[%s223 + $0xa] sm:$0x1]
    %v470 = vld [vmem:[%s223 + $0x12] sm:$0x1]
    %v471 = vld [vmem:[%s223 + $0x1a] sm:$0x1]
    %s472 = scalar_lea.vmem %s196, 8
    %v473 = vld [vmem:[%s472] sm:$0xf]
    %s474 = scalar_lea.vmem %s208, 8
    %v475 = vld [vmem:[%s474] sm:$0xf]
    %v476 = vsub.f32 %v473, %v475
    %v481 = vrot.slane %v469, 7
    %v482 = vsel %vm403, %v481, %v468
    %v483 = vrot.slane %v470, 6
    %v484 = vsel %vm406, %v483, %v482
    %v485 = vrot.slane %v471, 5
    %v486 = vsel %vm409, %v485, %v484
    %v488 = vmul.f32 %v476, %v486
    %s489 = scalar_lea.vmem [#allocation4], 8
    %v490 = vld [vmem:[%s489] sm:$0xf]
    %v491 = vmul.f32 %v490, %v486
    %v492 = vmul.f32 %v488, 0.5
    %v493 = vmul.f32 %v492, %v488
    %v494 = vmul.f32 %v491, -0.5
    %v495 = vmul.f32 %v494, 1.442695
    %v496 = vpow.pop %v495
    %v497 = vmul.f32 %v493, %v496
    %v498 = vmul.f32 %v491, 0.25
    %v499 = vadd.f32 %v497, %v498
    %s500 = sadd.s32 %s260, 2
    %p501 = scmp.lt.s32.totalorder %s500, 6
    %s502 = scalar_select %p501, 1, 0
    %v503 = vstv %s502
    %vm504 = vcmp.eq.s32.totalorder %v503, 1
    %v505 = vsel %vm504, %v499, 0.0
    %v506 = vadd.f32 %v467, %v505
    %v507 = vld [vmem:[%s223 + $0x3] sm:$0x1]
    %v508 = vld [vmem:[%s223 + $0xb] sm:$0x1]
    %v509 = vld [vmem:[%s223 + $0x13] sm:$0x1]
    %v510 = vld [vmem:[%s223 + $0x1b] sm:$0x1]
    %s511 = scalar_lea.vmem %s196, 12
    %v512 = vld [vmem:[%s511] sm:$0xf]
    %s513 = scalar_lea.vmem %s208, 12
    %v514 = vld [vmem:[%s513] sm:$0xf]
    %v515 = vsub.f32 %v512, %v514
    %v520 = vrot.slane %v508, 7
    %v521 = vsel %vm403, %v520, %v507
    %v522 = vrot.slane %v509, 6
    %v523 = vsel %vm406, %v522, %v521
    %v524 = vrot.slane %v510, 5
    %v525 = vsel %vm409, %v524, %v523
    %v527 = vmul.f32 %v515, %v525
    %s528 = scalar_lea.vmem [#allocation4], 12
    %v529 = vld [vmem:[%s528] sm:$0xf]
    %v530 = vmul.f32 %v529, %v525
    %v531 = vmul.f32 %v527, 0.5
    %v532 = vmul.f32 %v531, %v527
    %v533 = vmul.f32 %v530, -0.5
    %v534 = vmul.f32 %v533, 1.442695
    %v535 = vpow.pop %v534
    %v536 = vmul.f32 %v532, %v535
    %v537 = vmul.f32 %v530, 0.25
    %v538 = vadd.f32 %v536, %v537
    %s539 = sadd.s32 %s260, 3
    %p540 = scmp.lt.s32.totalorder %s539, 6
    %s541 = scalar_select %p540, 1, 0
    %v542 = vstv %s541
    %vm543 = vcmp.eq.s32.totalorder %v542, 1
    %v544 = vsel %vm543, %v538, 0.0
    %v545 = vadd.f32 %v506, %v544
    %v546 = vld [vmem:[%s223 + $0x4] sm:$0x1]
    %v547 = vld [vmem:[%s223 + $0xc] sm:$0x1]
    %v548 = vld [vmem:[%s223 + $0x14] sm:$0x1]
    %v549 = vld [vmem:[%s223 + $0x1c] sm:$0x1]
    %s550 = scalar_lea.vmem %s196, 16
    %v551 = vld [vmem:[%s550] sm:$0xf]
    %s552 = scalar_lea.vmem %s208, 16
    %v553 = vld [vmem:[%s552] sm:$0xf]
    %v554 = vsub.f32 %v551, %v553
    %v559 = vrot.slane %v547, 7
    %v560 = vsel %vm403, %v559, %v546
    %v561 = vrot.slane %v548, 6
    %v562 = vsel %vm406, %v561, %v560
    %v563 = vrot.slane %v549, 5
    %v564 = vsel %vm409, %v563, %v562
    %v566 = vmul.f32 %v554, %v564
    %s567 = scalar_lea.vmem [#allocation4], 16
    %v568 = vld [vmem:[%s567] sm:$0xf]
    %v569 = vmul.f32 %v568, %v564
    %v570 = vmul.f32 %v566, 0.5
    %v571 = vmul.f32 %v570, %v566
    %v572 = vmul.f32 %v569, -0.5
    %v573 = vmul.f32 %v572, 1.442695
    %v574 = vpow.pop %v573
    %v575 = vmul.f32 %v571, %v574
    %v576 = vmul.f32 %v569, 0.25
    %v577 = vadd.f32 %v575, %v576
    %s578 = sadd.s32 %s260, 4
    %p579 = scmp.lt.s32.totalorder %s578, 6
    %s580 = scalar_select %p579, 1, 0
    %v581 = vstv %s580
    %vm582 = vcmp.eq.s32.totalorder %v581, 1
    %v583 = vsel %vm582, %v577, 0.0
    %v584 = vadd.f32 %v545, %v583
    %v585 = vld [vmem:[%s223 + $0x5] sm:$0x1]
    %v586 = vld [vmem:[%s223 + $0xd] sm:$0x1]
    %v587 = vld [vmem:[%s223 + $0x15] sm:$0x1]
    %v588 = vld [vmem:[%s223 + $0x1d] sm:$0x1]
    %s589 = scalar_lea.vmem %s196, 20
    %v590 = vld [vmem:[%s589] sm:$0xf]
    %s591 = scalar_lea.vmem %s208, 20
    %v592 = vld [vmem:[%s591] sm:$0xf]
    %v593 = vsub.f32 %v590, %v592
    %v598 = vrot.slane %v586, 7
    %v599 = vsel %vm403, %v598, %v585
    %v600 = vrot.slane %v587, 6
    %v601 = vsel %vm406, %v600, %v599
    %v602 = vrot.slane %v588, 5
    %v603 = vsel %vm409, %v602, %v601
    %v605 = vmul.f32 %v593, %v603
    %s606 = scalar_lea.vmem [#allocation4], 20
    %v607 = vld [vmem:[%s606] sm:$0xf]
    %v608 = vmul.f32 %v607, %v603
    %v609 = vmul.f32 %v605, 0.5
    %v610 = vmul.f32 %v609, %v605
    %v611 = vmul.f32 %v608, -0.5
    %v612 = vmul.f32 %v611, 1.442695
    %v613 = vpow.pop %v612
    %v614 = vmul.f32 %v610, %v613
    %v615 = vmul.f32 %v608, 0.25
    %v616 = vadd.f32 %v614, %v615
    %s617 = sadd.s32 %s260, 5
    %p618 = scmp.lt.s32.totalorder %s617, 6
    %s619 = scalar_select %p618, 1, 0
    %v620 = vstv %s619
    %vm621 = vcmp.eq.s32.totalorder %v620, 1
    %v622 = vsel %vm621, %v616, 0.0
    %v623 = vadd.f32 %v584, %v622
    %v624 = vld [vmem:[#allocation3] sm:$0xf]
    %v625 = vadd.f32 %v624, %v623
    %vm626 = vcmask 257024
    %627 = vst.msk [vmem:[#allocation3] sm:$0xf] %vm626, %v625
    // Predicated region
    $region54: #{tpu_custom_call.1} parent=1 // pred_check
      %p628 = pneg %p251
    $region55: #{tpu_custom_call.1} parent=1 // pred_check_branch
      %630 = sbr.rel (%p628) target = $region57
    $region56: #{tpu_custom_call.1} parent=1 // pred_region
      %v631 = vld [vmem:[#allocation2] sm:$0xf]
      %v632 = vsel %vm376, %v631, 0.0
      %633 = vadd.xlane.f32.xlu0 %v632
      %v634 = vpop.xlane.xlu0 %633
      %v635 = vrot.slane %v634, 4
      %v636 = vadd.f32 %v634, %v635
      %v637 = vrot.slane %v636, 2
      %v638 = vadd.f32 %v636, %v637
      %v639 = vrot.slane %v638, 1
      %v640 = vadd.f32 %v638, %v639
      %s641 = vtos %v640
      %v642 = vstv %s641
      %643 = vst [vmem:[#allocation12] sm:$0xff] %v642
      %v644 = vld [vmem:[#allocation3] sm:$0xf]
      %v645 = vsel %vm626, %v644, 0.0
      %646 = vadd.xlane.f32.xlu0 %v645
      %v647 = vpop.xlane.xlu0 %646
      %v648 = vrot.slane %v647, 4
      %v649 = vadd.f32 %v647, %v648
      %v650 = vrot.slane %v649, 2
      %v651 = vadd.f32 %v649, %v650
      %v652 = vrot.slane %v651, 1
      %v653 = vadd.f32 %v651, %v652
      %s654 = vtos %v653
      %v655 = vstv %s654
      %656 = vst [vmem:[#allocation13] sm:$0xff] %v655
    $region57: #{tpu_custom_call.1} parent=1 // pred_fallthru
      _
    // Predicated region
    $region58: #{tpu_custom_call.1} parent=1 // pred_check
      _
    $region59: #{tpu_custom_call.1} parent=1 // pred_check_branch
      %658 = sbr.rel (0) target = $region61
    $region60: #{tpu_custom_call.1} parent=1 // pred_region
      %s660 = ssub.s32 128, 128
      %661 = vsyncadd [#allocation6], %s660
      %s663 = sshll.u32 [#allocation12], 4
      %s664 = int_to_ptr.vmem [resolvable:$true] %s663
      %666 = dma.vmem_to_hbm [thread:$0]  %s664, 128, %s8, [#allocation6]
    $region61: #{tpu_custom_call.1} parent=1 // pred_fallthru
      _
    // Predicated region
    $region62: #{tpu_custom_call.1} parent=1 // pred_check
      _
    $region63: #{tpu_custom_call.1} parent=1 // pred_check_branch
      %668 = sbr.rel (0) target = $region65
    $region64: #{tpu_custom_call.1} parent=1 // pred_region
      %s670 = ssub.s32 128, 128
      %671 = vsyncadd [#allocation14], %s670
      %s673 = sshll.u32 [#allocation13], 4
      %s674 = int_to_ptr.vmem [resolvable:$true] %s673
      %676 = dma.vmem_to_hbm [thread:$0]  %s674, 128, %s9, [#allocation14]
    $region65: #{tpu_custom_call.1} parent=1 // pred_fallthru
      _
    // Predicated region
    $region66: #{tpu_custom_call.1} parent=1 // pred_check
      _
    $region67: #{tpu_custom_call.1} parent=1 // pred_check_branch
      %678 = sbr.rel (0) target = $region69
    $region68: #{tpu_custom_call.1} parent=1 // pred_region
      %679 = dma.done [#allocation6], 128
    $region69: #{tpu_custom_call.1} parent=1 // pred_fallthru
      _
    // Predicated region
    $region70: #{tpu_custom_call.1} parent=1 // pred_check
      _
    $region71: #{tpu_custom_call.1} parent=1 // pred_check_branch
      %681 = sbr.rel (0) target = $region73
    $region72: #{tpu_custom_call.1} parent=1 // pred_region
      %682 = dma.done [#allocation14], 128
    $region73: #{tpu_custom_call.1} parent=1 // pred_fallthru
      _
    %683 = vsyncpa [#allocation5], 1
    %684 = vsyncpa [#allocation8], 1
    %685 = vsyncpa [#allocation11], 1
    %686 = vsyncpa [#allocation6], 1
    %687 = vsyncpa [#allocation14], 1

</llo_original>
